<compile_context>
chip_gen: v6e
topology: v6e:2x2x1
jax: 0.10.0
libtpu: 0.0.40
codegen_flags: <defaults>
</compile_context>

<pallas_src>
import functools

import jax
import jax.numpy as jnp
from jax import lax
from jax.experimental import pallas as pl
from jax.experimental.pallas import tpu as pltpu


def _round_up(n, mult):
    return ((n + mult - 1) // mult) * mult


def _round_down(n, mult):
    return (n // mult) * mult


def _vmem_limit_bytes():
    """Generation-aware VMEM limit: 3/4 of physical per-core capacity."""
    cap = 64 << 20  # conservative fallback (v7x-sized)
    try:
        cap = int(pltpu.get_tpu_info().vmem_capacity_bytes)
    except Exception:
        pass
    return (cap * 3) // 4


def _feature_block_spec(block_shape, index_map, nbuf):
    """BlockSpec with deeper input pipelining when the JAX version supports it."""
    if nbuf > 2:
        try:
            return pl.BlockSpec(block_shape, index_map,
                                pipeline_mode=pl.Buffered(nbuf))
        except Exception:
            pass
    return pl.BlockSpec(block_shape, index_map)


def _pick_tk(K, per_col_bytes, feat_budget, tk_cap):
    """Largest K tile (multiple of 128, capped) fitting the VMEM budget."""
    if K <= 128:
        return K, 2                                   # single full-dim block
    want = min(_round_up(K, 128), max(_round_up(tk_cap, 128), 128))
    tk, nbuf = 128, 2
    for cand_nbuf in (3, 2):
        fit = _round_down(feat_budget // max(cand_nbuf * per_col_bytes, 1), 128)
        if fit >= 128:
            tk, nbuf = min(want, fit), cand_nbuf
            break
    steps = -(-K // tk)
    if steps <= 2:
        nbuf = 2                                      # 3rd buffer would be wasted
    return tk, nbuf


def _gram_kernel_1d(f_ref, g_ref, *, k_total, tk, inv_total, mxu_dtype):
    """G += F_tile @ F_tile^T over the K grid; resident (M, M) accumulator."""
    k = pl.program_id(0)

    @pl.when(k == 0)
    def _init():
        g_ref[...] = jnp.zeros_like(g_ref)

    f = f_ref[...]
    if k_total % tk != 0:
        # Mask the stale columns of the last (partial) K tile before the dot.
        valid = lax.broadcasted_iota(jnp.int32, f.shape, 1) < (k_total - k * tk)
        f = jnp.where(valid, f, jnp.zeros_like(f))
    f = f.astype(mxu_dtype)
    # Contract the last (lane) axis of both operands -> MXU, no materialized
    # transpose of F (same convention as the reference flash-attention q.k^T).
    g_ref[...] += lax.dot_general(
        f, f, dimension_numbers=(((1,), (1,)), ((), ())),
        preferred_element_type=jnp.float32)

    @pl.when(k == pl.num_programs(0) - 1)
    def _fin():
        g_ref[...] *= jnp.float32(inv_total)


def _gram_kernel_2d(lhs_ref, rhs_ref, g_ref, *, k_total, tk, inv_total, mxu_dtype):
    """Row-tiled variant: grid = (row tiles [parallel], K tiles [arbitrary])."""
    k = pl.program_id(1)

    @pl.when(k == 0)
    def _init():
        g_ref[...] = jnp.zeros_like(g_ref)

    lhs = lhs_ref[...]
    rhs = rhs_ref[...]
    if k_total % tk != 0:
        rem = k_total - k * tk
        lhs = jnp.where(lax.broadcasted_iota(jnp.int32, lhs.shape, 1) < rem,
                        lhs, jnp.zeros_like(lhs))
        rhs = jnp.where(lax.broadcasted_iota(jnp.int32, rhs.shape, 1) < rem,
                        rhs, jnp.zeros_like(rhs))
    lhs = lhs.astype(mxu_dtype)
    rhs = rhs.astype(mxu_dtype)
    g_ref[...] += lax.dot_general(
        lhs, rhs, dimension_numbers=(((1,), (1,)), ((), ())),
        preferred_element_type=jnp.float32)

    @pl.when(k == pl.num_programs(1) - 1)
    def _fin():
        g_ref[...] *= jnp.float32(inv_total)


def gram_matrix(x, *, mxu_dtype=jnp.bfloat16, _tk_cap=8192, _tm_cap=512,
                _force_row_tiling=False):
    """Pallas equivalent of the PyTorch gram_matrix: (a,b,c,d) -> (a*b, a*b)."""
    a, b, c, d = x.shape
    M, K = a * b, c * d
    features = x.reshape(M, K)            # no pad, no dtype copy in HBM
    itemsize = features.dtype.itemsize
    inv_total = 1.0 / float(M * K)

    vmem_limit = _vmem_limit_bytes()
    budget = max(vmem_limit - (8 << 20), 8 << 20)   # headroom for Mosaic scratch

    acc_bytes_full = 2 * M * M * 4        # resident (M, M) f32 output (2x buffered)
    use_row_tiling = _force_row_tiling or acc_bytes_full > budget // 2

    if not use_row_tiling:
        # ---- Path A: 1-D reduction grid over K; F is read exactly once. ----
        feat_budget = budget - acc_bytes_full
        tk, nbuf = _pick_tk(K, M * itemsize, feat_budget, _tk_cap)
        kernel = functools.partial(
            _gram_kernel_1d, k_total=K, tk=tk, inv_total=inv_total,
            mxu_dtype=mxu_dtype)
        return pl.pallas_call(
            kernel,
            out_shape=jax.ShapeDtypeStruct((M, M), jnp.float32),
            grid=(pl.cdiv(K, tk),),
            in_specs=[_feature_block_spec((M, tk), lambda k: (0, k), nbuf)],
            out_specs=pl.BlockSpec((M, M), lambda k: (0, 0)),
            compiler_params=pltpu.CompilerParams(
                dimension_semantics=("arbitrary",),
                vmem_limit_bytes=vmem_limit),
        )(features)

    # ---- Path B: large M.  2-D grid (parallel row tiles x arbitrary K). ----
    tm = min(_round_up(max(min(_tm_cap, M), 8), 8), _round_up(M, 8))
    while tm > 8 and 2 * tm * M * 4 > budget // 2:
        tm = max(8, _round_down(tm // 2, 8))
    feat_budget = max(budget - 2 * tm * M * 4, 1)
    tk, nbuf = _pick_tk(K, (tm + M) * itemsize, feat_budget, _tk_cap)
    kernel = functools.partial(
        _gram_kernel_2d, k_total=K, tk=tk, inv_total=inv_total,
        mxu_dtype=mxu_dtype)
    return pl.pallas_call(
        kernel,
        out_shape=jax.ShapeDtypeStruct((M, M), jnp.float32),
        grid=(pl.cdiv(M, tm), pl.cdiv(K, tk)),
        in_specs=[
            _feature_block_spec((tm, tk), lambda i, k: (i, k), nbuf),  # row tile
            _feature_block_spec((M, tk), lambda i, k: (0, k), nbuf),   # full width
        ],
        out_specs=pl.BlockSpec((tm, M), lambda i, k: (i, 0)),
        compiler_params=pltpu.CompilerParams(
            dimension_semantics=("parallel", "arbitrary"),
            vmem_limit_bytes=vmem_limit),
    )(features, features)


class StyleLoss:
    """JAX/Pallas port of the PyTorch StyleLoss module (forward pass)."""

    def __init__(self, target_feature):
        # target gram is a constant (detached in the PyTorch original)
        self.target = lax.stop_gradient(gram_matrix(target_feature))
        self.loss = None

    def forward(self, x):
        G = gram_matrix(x)
        # TODO(synk): optionally fuse this MSE-vs-target epilogue into the final
        # pl.when of the gram kernel (target as a constant-index-map input, scalar
        # loss output) to skip the (M, M) HBM round-trip when only the loss is used.
        self.loss = jnp.mean((G - self.target) ** 2)
        return x  # identity pass-through, same as the PyTorch module

    __call__ = forward


if __name__ == "__main__":
    key = jax.random.PRNGKey(0)
    k_tgt, k_in, k_b = jax.random.split(key, 3)

    def _ref_gram(t):
        # Reference matches the kernel's bf16 MXU feed / f32 accumulation.
        a, b, c, d = t.shape
        f = t.reshape(a * b, c * d).astype(jnp.bfloat16).astype(jnp.float32)
        g = jnp.dot(f, f.T, precision=lax.Precision.HIGHEST)
        return g / (a * b * c * d)

    # 1) StyleLoss forward at a small conv-feature shape.
    target_feature = jax.random.normal(k_tgt, (2, 4, 16, 16), dtype=jnp.float32)
    x = jax.random.normal(k_in, (2, 4, 16, 16), dtype=jnp.float32)

    module = StyleLoss(target_feature)
    out = jax.block_until_ready(module(x))
    loss = jax.block_until_ready(module.loss)

    ref_loss = jnp.mean((_ref_gram(x) - _ref_gram(target_feature)) ** 2)
    assert out.shape == x.shape and bool(jnp.allclose(out, x))
    assert bool(jnp.allclose(loss, ref_loss, rtol=1e-3, atol=1e-7)), (loss, ref_loss)

    # 2) Multi-step K grid with a ragged (masked) last tile: M=16, K=480, tk=128.
    y = jax.random.normal(k_b, (1, 16, 24, 20), dtype=jnp.float32)
    g = jax.block_until_ready(gram_matrix(y, _tk_cap=128))
    assert bool(jnp.allclose(g, _ref_gram(y), rtol=1e-3, atol=1e-6)), "ragged-K gram mismatch"

    # 3) Large-M path (row-tiled 2-D grid), forced at a small size.
    g2 = jax.block_until_ready(
        gram_matrix(y, _tk_cap=128, _tm_cap=8, _force_row_tiling=True))
    assert bool(jnp.allclose(g2, _ref_gram(y), rtol=1e-3, atol=1e-6)), "row-tiled gram mismatch"

    print("KERNEL_OK")
</pallas_src>

<mosaic_0001>
module attributes {stable_mosaic.version = 11 : i64} {
  func.func @_gram_kernel_1d(%arg0: i32, %arg1: memref<8x256xf32, #tpu.memory_space<vmem>>, %arg2: memref<8x8xf32, #tpu.memory_space<vmem>>) attributes {dimension_semantics = [#tpu.dimension_semantics<arbitrary>], iteration_bounds = array<i64: 1>, scalar_prefetch = 0 : i64, scratch_operands = 0 : i64, tpu.core_type = #tpu.core_type<tc>, window_params = [{transform_indices = @transform_0, window_bounds = array<i64: 8, 256>}, {pipeline_mode = #tpu.pipeline_mode<synchronous>, transform_indices = @transform_1, window_bounds = array<i64: 8, 8>}]} {
    %c0_i32 = arith.constant 0 : i32
    %0 = arith.cmpi eq, %arg0, %c0_i32 : i32
    %1 = arith.extui %0 : i1 to i32
    %c0_i32_0 = arith.constant 0 : i32
    %2 = arith.cmpi ne, %1, %c0_i32_0 : i32
    scf.if %2 {
      %cst_8 = arith.constant 0.000000e+00 : f32
      %12 = vector.broadcast %cst_8 : f32 to vector<8x8xf32>
      %c0_9 = arith.constant 0 : index
      %c0_10 = arith.constant 0 : index
      %13 = vector.load %arg2[%c0_9, %c0_10] : memref<8x8xf32, #tpu.memory_space<vmem>>, vector<8x8xf32>
      tpu.vector_store %arg2[%c0_9, %c0_10], %12 {strides = array<i32>} : memref<8x8xf32, #tpu.memory_space<vmem>>, vector<8x8xf32>,
    } else {
    }
    %c0 = arith.constant 0 : index
    %c0_1 = arith.constant 0 : index
    %3 = vector.load %arg1[%c0, %c0_1] : memref<8x256xf32, #tpu.memory_space<vmem>>, vector<8x256xf32>
    %4 = arith.truncf %3 : vector<8x256xf32> to vector<8x256xbf16>
    %c0_2 = arith.constant 0 : index
    %c0_3 = arith.constant 0 : index
    %5 = vector.load %arg2[%c0_2, %c0_3] : memref<8x8xf32, #tpu.memory_space<vmem>>, vector<8x8xf32>
    %cst = arith.constant dense<0.000000e+00> : vector<8x8xf32>
    %6 = tpu.matmul %4, %4, %cst {dimension_numbers = #tpu.dot_dimension_numbers<[1], [1], [0], [0], [0, 0, 1, 0], [], []>} : vector<8x256xbf16>, vector<8x256xbf16>, vector<8x8xf32> -> vector<8x8xf32>
    %7 = arith.addf %5, %6 : vector<8x8xf32>
    %c0_4 = arith.constant 0 : index
    %c0_5 = arith.constant 0 : index
    %8 = vector.load %arg2[%c0_4, %c0_5] : memref<8x8xf32, #tpu.memory_space<vmem>>, vector<8x8xf32>
    tpu.vector_store %arg2[%c0_4, %c0_5], %7 {strides = array<i32>} : memref<8x8xf32, #tpu.memory_space<vmem>>, vector<8x8xf32>,
    %c0_i32_6 = arith.constant 0 : i32
    %9 = arith.cmpi eq, %arg0, %c0_i32_6 : i32
    %10 = arith.extui %9 : i1 to i32
    %c0_i32_7 = arith.constant 0 : i32
    %11 = arith.cmpi ne, %10, %c0_i32_7 : i32
    scf.if %11 {
      %c0_8 = arith.constant 0 : index
      %c0_9 = arith.constant 0 : index
      %12 = vector.load %arg2[%c0_8, %c0_9] : memref<8x8xf32, #tpu.memory_space<vmem>>, vector<8x8xf32>
      %cst_10 = arith.constant 4.8828125E-4 : f32
      %13 = vector.broadcast %cst_10 : f32 to vector<8x8xf32>
      %14 = arith.mulf %12, %13 : vector<8x8xf32>
      %c0_11 = arith.constant 0 : index
      %c0_12 = arith.constant 0 : index
      %15 = vector.load %arg2[%c0_11, %c0_12] : memref<8x8xf32, #tpu.memory_space<vmem>>, vector<8x8xf32>
      tpu.vector_store %arg2[%c0_11, %c0_12], %14 {strides = array<i32>} : memref<8x8xf32, #tpu.memory_space<vmem>>, vector<8x8xf32>,
    } else {
    }
    return
  }
  func.func @transform_0(%arg0: i32) -> (i32, i32) {
    %c0_i32 = arith.constant 0 : i32
    %c0_i32_0 = arith.constant 0 : i32
    return %c0_i32, %arg0 : i32, i32
  }
  func.func @transform_1(%arg0: i32) -> (i32, i32) {
    %c0_i32 = arith.constant 0 : i32
    %c0_i32_0 = arith.constant 0 : i32
    %c0_i32_1 = arith.constant 0 : i32
    return %c0_i32, %c0_i32_0 : i32, i32
  }
}

</mosaic_0001>

<llo_original>
// kernel: tpu_custom_call.1
$region0: #{tpu_custom_call.1}
  #allocation0 [shape = 'u32[]', space=smem, size = 0x4, offset = 0x4, fixed_abs, tag = 'smem constant byte address 0x4 - core index']
  #allocation1 [shape = 'u32[144,128]{1,0:T(1,128)}', space=vmem, size = 0x12000, scoped, tag = 'internal scratch']
  %s0 = inlined_call_operand.hbm [shape: f32[8,256], index: 0, kind: input, shape index: {}]
  %s1 = inlined_call_operand.hbm [shape: f32[8,8], index: 1, kind: output, shape index: {}]
  %s2 = sld [smem:[#allocation0]]
  $region26: #{tpu_custom_call.1} parent=0
    _
  %s4 = ssub.s32 1, %s2
  %s5 = scalar_select 0, %s4, %s2
  $region1: #{tpu_custom_call.1} parent=0
    #allocation2 [shape = 'u8[8192]{0}', space=vmem, size = 0x2000, scoped, tag = 'input window, operand 0, single buffered']
    #allocation3 [shape = 's32[1]{0}', space=sflag, size = 0x4, scoped, tag = 'scoped memory for tpu_custom_call.1']
    #allocation4 [shape = 's32[1]{0}', space=sflag, size = 0x4, scoped, tag = 'scoped memory for tpu_custom_call.1']
    #allocation5 [shape = 'u8[4096]{0}', space=vmem, size = 0x1000, scoped, tag = 'output window, operand 0, single buffered']
    %6 = vsyncpa [#allocation3], 0
    %7 = vsyncpa [#allocation4], 0
    // Predicated region
    $region2: #{tpu_custom_call.1} parent=1 // pred_check
      _
    $region3: #{tpu_custom_call.1} parent=1 // pred_check_branch
      %9 = sbr.rel (0) target = $region5
    $region4: #{tpu_custom_call.1} parent=1 // pred_region
      %s11 = ssub.s32 256, 256
      %12 = vsyncadd [#allocation3], %s11
      %s14 = sshll.u32 [#allocation2], 4
      %s15 = int_to_ptr.vmem [resolvable:$true] %s14
      %17 = dma.hbm_to_vmem [thread:$0]  %s0, 256, %s15, [#allocation3]
    $region5: #{tpu_custom_call.1} parent=1 // pred_fallthru
      _
    // Predicated region
    $region6: #{tpu_custom_call.1} parent=1 // pred_check
      _
    $region7: #{tpu_custom_call.1} parent=1 // pred_check_branch
      %19 = sbr.rel (0) target = $region9
    $region8: #{tpu_custom_call.1} parent=1 // pred_region
      %20 = dma.done [#allocation3], 256
    $region9: #{tpu_custom_call.1} parent=1 // pred_fallthru
      _
    %p22 = scmp.eq.s32.totalorder 0, 0
    // Predicated region
    $region10: #{tpu_custom_call.1} parent=1 // pred_check
      %p23 = pneg %p22
    $region11: #{tpu_custom_call.1} parent=1 // pred_check_branch
      %25 = sbr.rel (%p23) target = $region13
    $region12: #{tpu_custom_call.1} parent=1 // pred_region
      %vm26 = vcmask 64512
      %27 = vst.msk [vmem:[#allocation5] sm:$0xff] %vm26, 0.0
    $region13: #{tpu_custom_call.1} parent=1 // pred_fallthru
      _
    %v28 = vld [vmem:[#allocation2] sm:$0xff]
    %v29 = vld [vmem:[#allocation2 + $0x8] sm:$0xff]
    %v30 = vpack.c.bf16 %v28, %v28
    %v31 = vpack.c.bf16 %v29, %v29
    %v32 = vld [vmem:[#allocation5] sm:$0xff]
    %33 = vmatprep.subr.bf16.mxu0 0
    %34 = vmatpush1.bf16.xpose.msra.mxu0 0
    %35 = vmatprep.subr.bf16.mxu0 0
    %36 = vmatpush1.bf16.xpose.msra.mxu0 0
    %37 = vmatprep.subr.bf16.mxu0 0
    %38 = vmatpush1.bf16.xpose.msra.mxu0 0
    %39 = vmatprep.subr.bf16.mxu0 0
    %40 = vmatpush1.bf16.xpose.msra.mxu0 0
    %41 = vmatprep.subr.bf16.mxu0 0
    %42 = vmatpush1.bf16.xpose.msra.mxu0 0
    %43 = vmatprep.subr.bf16.mxu0 0
    %44 = vmatpush1.bf16.xpose.msra.mxu0 0
    %45 = vmatprep.subr.bf16.mxu0 0
    %46 = vmatpush1.bf16.xpose.msra.mxu0 0
    %47 = vmatprep.subr.bf16.mxu0 %v31
    %48 = vmatpush1.bf16.xpose.msra.mxu0 %v30
    %49 = vmatprep.subr.bf16.mxu0 0
    %50 = vmatpush2.bf16.xpose.msra.mxu0 0
    %51 = vmatprep.subr.bf16.mxu0 0
    %52 = vmatpush2.bf16.xpose.msra.mxu0 0
    %53 = vmatprep.subr.bf16.mxu0 0
    %54 = vmatpush2.bf16.xpose.msra.mxu0 0
    %55 = vmatprep.subr.bf16.mxu0 0
    %56 = vmatpush2.bf16.xpose.msra.mxu0 0
    %57 = vmatprep.subr.bf16.mxu0 0
    %58 = vmatpush2.bf16.xpose.msra.mxu0 0
    %59 = vmatprep.subr.bf16.mxu0 0
    %60 = vmatpush2.bf16.xpose.msra.mxu0 0
    %61 = vmatprep.subr.bf16.mxu0 0
    %62 = vmatpush2.bf16.xpose.msra.mxu0 0
    %63 = vmatprep.subr.bf16.mxu0 0
    %64 = vmatpush2.bf16.xpose.msra.mxu0 0
    %65 = vmatprep.mubr.bf16.mxu0 %v31
    %66 = vmatmul.mubr.bf16.gmra.mxu0 %v30
    %v67 = vpop.f32.mrf.mxu0
    %v68 = vadd.f32 0.0, %v67
    %v69 = vpop.f32.mrf.mxu0
    %v70 = vpop.f32.mrf.mxu0
    %v71 = vpop.f32.mrf.mxu0
    %72 = vdwg.mxu0
    %v73 = vadd.f32 %v32, %v68
    %vm74 = vcmask 64512
    %75 = vst.msk [vmem:[#allocation5] sm:$0xff] %vm74, %v73
    // Predicated region
    $region14: #{tpu_custom_call.1} parent=1 // pred_check
      %p76 = pneg %p22
    $region15: #{tpu_custom_call.1} parent=1 // pred_check_branch
      %78 = sbr.rel (%p76) target = $region17
    $region16: #{tpu_custom_call.1} parent=1 // pred_region
      %v79 = vld [vmem:[#allocation5] sm:$0xff]
      %v80 = vmul.f32 %v79, 0.00048828125
      %81 = vst.msk [vmem:[#allocation5] sm:$0xff] %vm74, %v80
    $region17: #{tpu_custom_call.1} parent=1 // pred_fallthru
      _
    // Predicated region
    $region18: #{tpu_custom_call.1} parent=1 // pred_check
      _
    $region19: #{tpu_custom_call.1} parent=1 // pred_check_branch
      %83 = sbr.rel (0) target = $region21
    $region20: #{tpu_custom_call.1} parent=1 // pred_region
      %s85 = ssub.s32 128, 128
      %86 = vsyncadd [#allocation4], %s85
      %s88 = sshll.u32 [#allocation5], 4
      %s89 = int_to_ptr.vmem [resolvable:$true] %s88
      %91 = dma.vmem_to_hbm [thread:$0]  %s89, 128, %s1, [#allocation4]
    $region21: #{tpu_custom_call.1} parent=1 // pred_fallthru
      _
    // Predicated region
    $region22: #{tpu_custom_call.1} parent=1 // pred_check
      _
    $region23: #{tpu_custom_call.1} parent=1 // pred_check_branch
      %93 = sbr.rel (0) target = $region25
    $region24: #{tpu_custom_call.1} parent=1 // pred_region
      %94 = dma.done [#allocation4], 128
    $region25: #{tpu_custom_call.1} parent=1 // pred_fallthru
      _
    %95 = vsyncpa [#allocation3], 1
    %96 = vsyncpa [#allocation4], 1

</llo_original>
